<compile_context>
chip_gen: v7x
topology: tpu7x:2x2x1
jax: 0.10.0
libtpu: 0.0.40
codegen_flags: <defaults>
</compile_context>

<pallas_src>
import functools

import jax
import jax.numpy as jnp
from jax.experimental import pallas as pl
from jax.experimental.pallas import tpu as pltpu  # noqa: F401  (kept for scaling TODOs)

DOUT_PAD = 128  # lane-dense decode output width (real dim_out is sliced in the wrapper)


def gen_rnn_kernel(ids_ref, table_ref, wh_ref, wd_ref, bd_ref, y_ref, *, seq, batch):
    """Whole-sequence kernel: fused embed -> serial recurrence -> batched decode.

    ids_ref  : (seq*batch, 1)    int32 token ids (time-major flattened)
    table_ref: (enc_in, H)       folded table = emb @ Wx^T + bx + bh   (f32)
    wh_ref   : (H, H)            hidden->hidden weight, pre-transposed (bf16)
    wd_ref   : (H, DOUT_PAD)     decode weight, pre-transposed + zero-padded (f32)
    bd_ref   : (1, DOUT_PAD)     decode bias, zero-padded (f32)
    y_ref    : (seq*batch, DOUT_PAD) output logits (lane-dense block store)
    """
    n = seq * batch
    enc_in, dim_h = table_ref.shape

    # ---- Prologue (off the serial critical path): fused embedding gather. ----
    # xproj[i] = table[ids[i]]  ==  onehot(ids) @ table, done as one MXU matmul.
    ids = ids_ref[...]                                              # (n, 1) int32
    vocab = jax.lax.broadcasted_iota(jnp.int32, (n, enc_in), 1)     # (n, enc_in)
    onehot = (ids == vocab).astype(jnp.float32)                     # (n, enc_in)
    xproj = jnp.dot(onehot, table_ref[...],
                    preferred_element_type=jnp.float32)             # (n, H)

    # ---- Serial recurrence: only h @ Wh + tanh sits on the critical path. ----
    wh = wh_ref[...]                                                # (H, H) bf16
    h = jnp.zeros((batch, dim_h), jnp.float32)
    hs = []
    for t in range(seq):                                            # static unroll
        pre = xproj[t * batch:(t + 1) * batch, :] + jnp.dot(
            h.astype(jnp.bfloat16), wh, preferred_element_type=jnp.float32)
        h = jnp.tanh(pre)
        hs.append(h)                                                # stays in vregs

    # ---- Batched decode: one MXU matmul + one unmasked lane-dense store. ----
    hs_all = jnp.concatenate(hs, axis=0)                            # (n, H)
    y_ref[...] = (jnp.dot(hs_all, wd_ref[...],
                          preferred_element_type=jnp.float32)
                  + bd_ref[...]).astype(y_ref.dtype)


def gen_prepare_params(emb, wx, bx, wh, bh, wd, bd):
    """One-time (call-invariant) parameter folding; keep out of the per-call path."""
    emb = emb.astype(jnp.float32)
    # Fold Embedding + Linear(dim_in -> H) + both hidden biases into one table.
    table = emb @ wx.T.astype(jnp.float32) + bx + bh                # (enc_in, H)
    wh_t = wh.T.astype(jnp.bfloat16)                                # (H, H)
    dim_out, dim_h = wd.shape
    wd_pad = jnp.zeros((dim_h, DOUT_PAD), jnp.float32).at[:, :dim_out].set(wd.T)
    bd_pad = jnp.zeros((1, DOUT_PAD), jnp.float32).at[:, :dim_out].set(
        bd.reshape(1, dim_out))
    return table, wh_t, wd_pad, bd_pad, dim_out


def gen_forward_pallas(x_ids, table, wh_t, wd_pad, bd_pad, *, dim_out):
    """x_ids: (seq, batch) int32 token ids. Returns logits (seq, batch, dim_out)."""
    seq, batch = x_ids.shape
    enc_in, dim_h = table.shape
    n = seq * batch

    ids2d = x_ids.reshape(n, 1).astype(jnp.int32)                   # time-major flatten

    cost = pl.CostEstimate(
        flops=2 * n * enc_in * dim_h            # one-hot embed matmul
              + 2 * n * dim_h * dim_h           # recurrence matmuls
              + 2 * n * dim_h * DOUT_PAD,       # decode matmul
        transcendentals=n * dim_h,              # tanh
        bytes_accessed=(ids2d.size * 4 + table.size * 4 + wh_t.size * 2
                        + wd_pad.size * 4 + bd_pad.size * 4 + n * DOUT_PAD * 4),
    )

    kernel = functools.partial(gen_rnn_kernel, seq=seq, batch=batch)
    # Single invocation, grid=(): everything fits trivially in VMEM at these
    # shapes, so default full-array BlockSpecs (resident VMEM operands) suffice.
    y_pad = pl.pallas_call(
        kernel,
        out_shape=jax.ShapeDtypeStruct((n, DOUT_PAD), jnp.float32),
        cost_estimate=cost,
    )(ids2d, table, wh_t, wd_pad, bd_pad)

    return y_pad[:, :dim_out].reshape(seq, batch, dim_out)


def gen_forward_ref(x_ids, emb, wx, bx, wh, bh, wd, bd):
    """Pure-JAX f32 reference of the same forward (for correctness check)."""
    x_enc = jnp.take(emb, x_ids, axis=0).astype(jnp.float32)        # (seq, batch, dim_in)
    batch = x_ids.shape[1]
    dim_h = wh.shape[0]
    h0 = jnp.zeros((batch, dim_h), jnp.float32)

    def step(h, x_t):
        h_new = jnp.tanh(x_t @ wx.T + bx + h @ wh.T + bh)
        return h_new, h_new

    _, hs = jax.lax.scan(step, h0, x_enc)                           # (seq, batch, H)
    return hs @ wd.T + bd                                           # (seq, batch, dim_out)


if __name__ == "__main__":
    # Small shapes consistent with Gen(rnn, enc_in, enc_out, dim_h, dim_in, dim_out):
    enc_in = 16          # vocab size
    enc_out = 32         # embedding dim == dim_in
    dim_in = enc_out
    dim_h = 32
    dim_out = 16         # output vocab logits
    seq, batch = 8, 8

    key = jax.random.PRNGKey(0)
    k = jax.random.split(key, 8)

    # Deterministic parameter init (shapes match nn.Embedding / nn.Linear).
    emb = jax.random.normal(k[0], (enc_in, enc_out), jnp.float32)       # Embedding weight
    wx = 0.1 * jax.random.normal(k[1], (dim_h, dim_in), jnp.float32)    # Linear(dim_in, dim_h)
    bx = 0.1 * jax.random.normal(k[2], (dim_h,), jnp.float32)
    wh = 0.1 * jax.random.normal(k[3], (dim_h, dim_h), jnp.float32)     # Linear(dim_h, dim_h)
    bh = 0.1 * jax.random.normal(k[4], (dim_h,), jnp.float32)
    wd = 0.1 * jax.random.normal(k[5], (dim_out, dim_h), jnp.float32)   # decode Linear(dim_h, dim_out)
    bd = 0.1 * jax.random.normal(k[6], (dim_out,), jnp.float32)

    x_ids = jax.random.randint(k[7], (seq, batch), 0, enc_in, jnp.int32)

    # One-time parameter folding (hoisted off the per-call path), then forward.
    table, wh_t, wd_pad, bd_pad, dim_out_ = gen_prepare_params(emb, wx, bx, wh, bh, wd, bd)
    fwd = jax.jit(gen_forward_pallas, static_argnames=("dim_out",))

    y = fwd(x_ids, table, wh_t, wd_pad, bd_pad, dim_out=dim_out_)
    y = jax.block_until_ready(y)

    y_ref = gen_forward_ref(x_ids, emb, wx, bx, wh, bh, wd, bd)
    assert y.shape == (seq, batch, dim_out)
    # bf16 recurrence weights => loosened tolerance vs the f32 reference.
    assert jnp.allclose(y, y_ref, atol=2e-2, rtol=2e-2), "mismatch vs reference"

    print("KERNEL_OK")
</pallas_src>

<mosaic_0001>
module attributes {stable_mosaic.version = 11 : i64} {
  func.func @gen_rnn_kernel(%arg0: memref<64x1xi32, #tpu.memory_space<vmem>>, %arg1: memref<16x32xf32, #tpu.memory_space<vmem>>, %arg2: memref<32x32xbf16, #tpu.memory_space<vmem>>, %arg3: memref<32x128xf32, #tpu.memory_space<vmem>>, %arg4: memref<1x128xf32, #tpu.memory_space<vmem>>, %arg5: memref<64x128xf32, #tpu.memory_space<vmem>>) attributes {dimension_semantics = [], scalar_prefetch = 0 : i64, scratch_operands = 0 : i64, tpu.core_type = #tpu.core_type<tc>} {
    %c0 = arith.constant 0 : index
    %c0_0 = arith.constant 0 : index
    %0 = vector.load %arg0[%c0, %c0_0] : memref<64x1xi32, #tpu.memory_space<vmem>>, vector<64x1xi32>
    %1 = tpu.iota {dimensions = array<i32: 1>} : vector<64x16xi32>
    %2 = vector.broadcast %0 : vector<64x1xi32> to vector<64x16xi32>
    %3 = arith.cmpi eq, %2, %1 : vector<64x16xi32>
    %4 = arith.extui %3 : vector<64x16xi1> to vector<64x16xi32>
    %5 = arith.sitofp %4 : vector<64x16xi32> to vector<64x16xf32>
    %c0_1 = arith.constant 0 : index
    %c0_2 = arith.constant 0 : index
    %6 = vector.load %arg1[%c0_1, %c0_2] : memref<16x32xf32, #tpu.memory_space<vmem>>, vector<16x32xf32>
    %cst = arith.constant dense<0.000000e+00> : vector<64x32xf32>
    %7 = tpu.matmul %5, %6, %cst {dimension_numbers = #tpu.dot_dimension_numbers<[1], [0], [0], [1], [0, 0, 1, 1], [], []>} : vector<64x16xf32>, vector<16x32xf32>, vector<64x32xf32> -> vector<64x32xf32>
    %c0_3 = arith.constant 0 : index
    %c0_4 = arith.constant 0 : index
    %8 = vector.load %arg2[%c0_3, %c0_4] : memref<32x32xbf16, #tpu.memory_space<vmem>>, vector<32x32xbf16>
    %cst_5 = arith.constant 0.000000e+00 : f32
    %9 = vector.broadcast %cst_5 : f32 to vector<8x32xf32>
    %10 = vector.extract_strided_slice %7 {offsets = [0, 0], sizes = [8, 32], strides = [1, 1]} : vector<64x32xf32> to vector<8x32xf32>
    %11 = arith.truncf %9 : vector<8x32xf32> to vector<8x32xbf16>
    %cst_6 = arith.constant dense<0.000000e+00> : vector<8x32xf32>
    %12 = tpu.matmul %11, %8, %cst_6 {dimension_numbers = #tpu.dot_dimension_numbers<[1], [0], [0], [1], [0, 0, 1, 1], [], []>} : vector<8x32xbf16>, vector<32x32xbf16>, vector<8x32xf32> -> vector<8x32xf32>
    %13 = arith.addf %10, %12 : vector<8x32xf32>
    %14 = math.tanh %13 : vector<8x32xf32>
    %15 = vector.extract_strided_slice %7 {offsets = [8, 0], sizes = [8, 32], strides = [1, 1]} : vector<64x32xf32> to vector<8x32xf32>
    %16 = arith.truncf %14 : vector<8x32xf32> to vector<8x32xbf16>
    %cst_7 = arith.constant dense<0.000000e+00> : vector<8x32xf32>
    %17 = tpu.matmul %16, %8, %cst_7 {dimension_numbers = #tpu.dot_dimension_numbers<[1], [0], [0], [1], [0, 0, 1, 1], [], []>} : vector<8x32xbf16>, vector<32x32xbf16>, vector<8x32xf32> -> vector<8x32xf32>
    %18 = arith.addf %15, %17 : vector<8x32xf32>
    %19 = math.tanh %18 : vector<8x32xf32>
    %20 = vector.extract_strided_slice %7 {offsets = [16, 0], sizes = [8, 32], strides = [1, 1]} : vector<64x32xf32> to vector<8x32xf32>
    %21 = arith.truncf %19 : vector<8x32xf32> to vector<8x32xbf16>
    %cst_8 = arith.constant dense<0.000000e+00> : vector<8x32xf32>
    %22 = tpu.matmul %21, %8, %cst_8 {dimension_numbers = #tpu.dot_dimension_numbers<[1], [0], [0], [1], [0, 0, 1, 1], [], []>} : vector<8x32xbf16>, vector<32x32xbf16>, vector<8x32xf32> -> vector<8x32xf32>
    %23 = arith.addf %20, %22 : vector<8x32xf32>
    %24 = math.tanh %23 : vector<8x32xf32>
    %25 = vector.extract_strided_slice %7 {offsets = [24, 0], sizes = [8, 32], strides = [1, 1]} : vector<64x32xf32> to vector<8x32xf32>
    %26 = arith.truncf %24 : vector<8x32xf32> to vector<8x32xbf16>
    %cst_9 = arith.constant dense<0.000000e+00> : vector<8x32xf32>
    %27 = tpu.matmul %26, %8, %cst_9 {dimension_numbers = #tpu.dot_dimension_numbers<[1], [0], [0], [1], [0, 0, 1, 1], [], []>} : vector<8x32xbf16>, vector<32x32xbf16>, vector<8x32xf32> -> vector<8x32xf32>
    %28 = arith.addf %25, %27 : vector<8x32xf32>
    %29 = math.tanh %28 : vector<8x32xf32>
    %30 = vector.extract_strided_slice %7 {offsets = [32, 0], sizes = [8, 32], strides = [1, 1]} : vector<64x32xf32> to vector<8x32xf32>
    %31 = arith.truncf %29 : vector<8x32xf32> to vector<8x32xbf16>
    %cst_10 = arith.constant dense<0.000000e+00> : vector<8x32xf32>
    %32 = tpu.matmul %31, %8, %cst_10 {dimension_numbers = #tpu.dot_dimension_numbers<[1], [0], [0], [1], [0, 0, 1, 1], [], []>} : vector<8x32xbf16>, vector<32x32xbf16>, vector<8x32xf32> -> vector<8x32xf32>
    %33 = arith.addf %30, %32 : vector<8x32xf32>
    %34 = math.tanh %33 : vector<8x32xf32>
    %35 = vector.extract_strided_slice %7 {offsets = [40, 0], sizes = [8, 32], strides = [1, 1]} : vector<64x32xf32> to vector<8x32xf32>
    %36 = arith.truncf %34 : vector<8x32xf32> to vector<8x32xbf16>
    %cst_11 = arith.constant dense<0.000000e+00> : vector<8x32xf32>
    %37 = tpu.matmul %36, %8, %cst_11 {dimension_numbers = #tpu.dot_dimension_numbers<[1], [0], [0], [1], [0, 0, 1, 1], [], []>} : vector<8x32xbf16>, vector<32x32xbf16>, vector<8x32xf32> -> vector<8x32xf32>
    %38 = arith.addf %35, %37 : vector<8x32xf32>
    %39 = math.tanh %38 : vector<8x32xf32>
    %40 = vector.extract_strided_slice %7 {offsets = [48, 0], sizes = [8, 32], strides = [1, 1]} : vector<64x32xf32> to vector<8x32xf32>
    %41 = arith.truncf %39 : vector<8x32xf32> to vector<8x32xbf16>
    %cst_12 = arith.constant dense<0.000000e+00> : vector<8x32xf32>
    %42 = tpu.matmul %41, %8, %cst_12 {dimension_numbers = #tpu.dot_dimension_numbers<[1], [0], [0], [1], [0, 0, 1, 1], [], []>} : vector<8x32xbf16>, vector<32x32xbf16>, vector<8x32xf32> -> vector<8x32xf32>
    %43 = arith.addf %40, %42 : vector<8x32xf32>
    %44 = math.tanh %43 : vector<8x32xf32>
    %45 = vector.extract_strided_slice %7 {offsets = [56, 0], sizes = [8, 32], strides = [1, 1]} : vector<64x32xf32> to vector<8x32xf32>
    %46 = arith.truncf %44 : vector<8x32xf32> to vector<8x32xbf16>
    %cst_13 = arith.constant dense<0.000000e+00> : vector<8x32xf32>
    %47 = tpu.matmul %46, %8, %cst_13 {dimension_numbers = #tpu.dot_dimension_numbers<[1], [0], [0], [1], [0, 0, 1, 1], [], []>} : vector<8x32xbf16>, vector<32x32xbf16>, vector<8x32xf32> -> vector<8x32xf32>
    %48 = arith.addf %45, %47 : vector<8x32xf32>
    %49 = math.tanh %48 : vector<8x32xf32>
    %50 = tpu.concatenate %14, %19, %24, %29, %34, %39, %44, %49 in 0 : vector<8x32xf32>, vector<8x32xf32>, vector<8x32xf32>, vector<8x32xf32>, vector<8x32xf32>, vector<8x32xf32>, vector<8x32xf32>, vector<8x32xf32> -> vector<64x32xf32>
    %c0_14 = arith.constant 0 : index
    %c0_15 = arith.constant 0 : index
    %51 = vector.load %arg3[%c0_14, %c0_15] : memref<32x128xf32, #tpu.memory_space<vmem>>, vector<32x128xf32>
    %cst_16 = arith.constant dense<0.000000e+00> : vector<64x128xf32>
    %52 = tpu.matmul %50, %51, %cst_16 {dimension_numbers = #tpu.dot_dimension_numbers<[1], [0], [0], [1], [0, 0, 1, 1], [], []>} : vector<64x32xf32>, vector<32x128xf32>, vector<64x128xf32> -> vector<64x128xf32>
    %c0_17 = arith.constant 0 : index
    %c0_18 = arith.constant 0 : index
    %53 = vector.load %arg4[%c0_17, %c0_18] : memref<1x128xf32, #tpu.memory_space<vmem>>, vector<1x128xf32>
    %54 = vector.broadcast %53 : vector<1x128xf32> to vector<64x128xf32>
    %55 = arith.addf %52, %54 : vector<64x128xf32>
    %c0_19 = arith.constant 0 : index
    %c0_20 = arith.constant 0 : index
    %56 = vector.load %arg5[%c0_19, %c0_20] : memref<64x128xf32, #tpu.memory_space<vmem>>, vector<64x128xf32>
    tpu.vector_store %arg5[%c0_19, %c0_20], %55 {strides = array<i32>} : memref<64x128xf32, #tpu.memory_space<vmem>>, vector<64x128xf32>,
    return
  }
}

</mosaic_0001>

<llo_original>
// kernel: gen_forward_pallas.1
$region0: #{gen_forward_pallas.1}
  #allocation0 [shape = 'u32[]', space=smem, size = 0x4, offset = 0x4, fixed_abs, tag = 'smem constant byte address 0x4 - core index']
  #allocation1 [shape = 'u32[144,128]{1,0:T(1,128)}', space=vmem, size = 0x12000, scoped, tag = 'internal scratch']
  %s0 = inlined_call_operand.vmem [shape: s32[64,1], index: 0, kind: input, shape index: {}]
  %s1 = inlined_call_operand.vmem [shape: f32[16,32], index: 1, kind: input, shape index: {}]
  %s2 = inlined_call_operand.vmem [shape: bf16[32,32], index: 2, kind: input, shape index: {}]
  %s3 = inlined_call_operand.vmem [shape: f32[32,128], index: 3, kind: input, shape index: {}]
  %s4 = inlined_call_operand.vmem [shape: f32[1,128], index: 4, kind: input, shape index: {}]
  %s5 = inlined_call_operand.vmem [shape: f32[64,128], index: 5, kind: output, shape index: {}]
  %s6 = sld [smem:[#allocation0]]
  $region30: #{gen_forward_pallas.1} parent=0
    _
  %s8 = ssub.s32 1, %s6
  %s9 = scalar_select 0, %s8, %s6
  // Predicated region
  $region2: #{gen_forward_pallas.1} parent=0 // pred_check
    _
  $region3: #{gen_forward_pallas.1} parent=0 // pred_check_branch
    %11 = sbr.rel (0) target = $region5
  $region4: #{gen_forward_pallas.1} parent=0 // pred_region
    _
  $region5: #{gen_forward_pallas.1} parent=0 // pred_fallthru
    _
  // Predicated region
  $region6: #{gen_forward_pallas.1} parent=0 // pred_check
    _
  $region7: #{gen_forward_pallas.1} parent=0 // pred_check_branch
    %13 = sbr.rel (0) target = $region9
  $region8: #{gen_forward_pallas.1} parent=0 // pred_region
    _
  $region9: #{gen_forward_pallas.1} parent=0 // pred_fallthru
    _
  // Predicated region
  $region10: #{gen_forward_pallas.1} parent=0 // pred_check
    _
  $region11: #{gen_forward_pallas.1} parent=0 // pred_check_branch
    %15 = sbr.rel (0) target = $region13
  $region12: #{gen_forward_pallas.1} parent=0 // pred_region
    _
  $region13: #{gen_forward_pallas.1} parent=0 // pred_fallthru
    _
  // Predicated region
  $region14: #{gen_forward_pallas.1} parent=0 // pred_check
    _
  $region15: #{gen_forward_pallas.1} parent=0 // pred_check_branch
    %17 = sbr.rel (0) target = $region17
  $region16: #{gen_forward_pallas.1} parent=0 // pred_region
    _
  $region17: #{gen_forward_pallas.1} parent=0 // pred_fallthru
    _
  // Predicated region
  $region18: #{gen_forward_pallas.1} parent=0 // pred_check
    _
  $region19: #{gen_forward_pallas.1} parent=0 // pred_check_branch
    %19 = sbr.rel (0) target = $region21
  $region20: #{gen_forward_pallas.1} parent=0 // pred_region
    _
  $region21: #{gen_forward_pallas.1} parent=0 // pred_fallthru
    _
  %v21 = vld [vmem:[%s0] sm:$0xff]
  %v22 = vld [vmem:[%s0 + $0x8] sm:$0xff]
  %v23 = vld [vmem:[%s0 + $0x10] sm:$0xff]
  %v24 = vld [vmem:[%s0 + $0x18] sm:$0xff]
  %v25 = vld [vmem:[%s0 + $0x20] sm:$0xff]
  %v26 = vld [vmem:[%s0 + $0x28] sm:$0xff]
  %v27 = vld [vmem:[%s0 + $0x30] sm:$0xff]
  %v28 = vld [vmem:[%s0 + $0x38] sm:$0xff]
  %v29 = vlaneseq
  %v30 = vand.u32 %v29, 127
  %31 = vset.pattern.permute.xlu0 0
  %32 = vperm.xlu0 %31, %v21
  %v33 = vpop.permute.xlu0 %32
  %34 = vset.pattern.permute.xlu0 0
  %35 = vperm.xlu0 %34, %v22
  %v36 = vpop.permute.xlu0 %35
  %37 = vset.pattern.permute.xlu0 0
  %38 = vperm.xlu0 %37, %v23
  %v39 = vpop.permute.xlu0 %38
  %40 = vset.pattern.permute.xlu0 0
  %41 = vperm.xlu0 %40, %v24
  %v42 = vpop.permute.xlu0 %41
  %43 = vset.pattern.permute.xlu0 0
  %44 = vperm.xlu0 %43, %v25
  %v45 = vpop.permute.xlu0 %44
  %46 = vset.pattern.permute.xlu0 0
  %47 = vperm.xlu0 %46, %v26
  %v48 = vpop.permute.xlu0 %47
  %49 = vset.pattern.permute.xlu0 0
  %50 = vperm.xlu0 %49, %v27
  %v51 = vpop.permute.xlu0 %50
  %52 = vset.pattern.permute.xlu0 0
  %53 = vperm.xlu0 %52, %v28
  %v54 = vpop.permute.xlu0 %53
  %vm55 = vcmp.eq.s32.totalorder %v33, %v30
  %vm56 = vcmp.eq.s32.totalorder %v36, %v30
  %vm57 = vcmp.eq.s32.totalorder %v39, %v30
  %vm58 = vcmp.eq.s32.totalorder %v42, %v30
  %vm59 = vcmp.eq.s32.totalorder %v45, %v30
  %vm60 = vcmp.eq.s32.totalorder %v48, %v30
  %vm61 = vcmp.eq.s32.totalorder %v51, %v30
  %vm62 = vcmp.eq.s32.totalorder %v54, %v30
  %v63 = vsel %vm55, 1, 0
  %v64 = vsel %vm56, 1, 0
  %v65 = vsel %vm57, 1, 0
  %v66 = vsel %vm58, 1, 0
  %v67 = vsel %vm59, 1, 0
  %v68 = vsel %vm60, 1, 0
  %v69 = vsel %vm61, 1, 0
  %v70 = vsel %vm62, 1, 0
  %v71 = vcvt.s32.f32 %v63
  %v72 = vcvt.s32.f32 %v64
  %v73 = vcvt.s32.f32 %v65
  %v74 = vcvt.s32.f32 %v66
  %v75 = vcvt.s32.f32 %v67
  %v76 = vcvt.s32.f32 %v68
  %v77 = vcvt.s32.f32 %v69
  %v78 = vcvt.s32.f32 %v70
  %v79 = vld [vmem:[%s1] sm:$0xff]
  %v80 = vld [vmem:[%s1 + $0x8] sm:$0xff]
  %vm81 = vcmask 130048
  %v83 = vsel %vm81, %v71, 0
  %v86 = vsel %vm81, %v72, 0
  %v89 = vsel %vm81, %v73, 0
  %v92 = vsel %vm81, %v74, 0
  %v95 = vsel %vm81, %v75, 0
  %v98 = vsel %vm81, %v76, 0
  %v101 = vsel %vm81, %v77, 0
  %v104 = vsel %vm81, %v78, 0
  %106 = vmatprep.subr.mxu0 0.0
  %107 = vmatpush1.msra.mxu0 %v79
  %108 = vmatprep.subr.mxu0 0.0
  %109 = vmatpush1.msra.mxu0 %v80
  %110 = vmatprep.subr.mxu0 0.0
  %111 = vmatpush1.msra.mxu0 0.0
  %112 = vmatprep.subr.mxu0 0.0
  %113 = vmatpush1.msra.mxu0 0.0
  %114 = vmatprep.subr.mxu0 0.0
  %115 = vmatpush1.msra.mxu0 0.0
  %116 = vmatprep.subr.mxu0 0.0
  %117 = vmatpush1.msra.mxu0 0.0
  %118 = vmatprep.subr.mxu0 0.0
  %119 = vmatpush1.msra.mxu0 0.0
  %120 = vmatprep.subr.mxu0 0.0
  %121 = vmatpush1.msra.mxu0 0.0
  %122 = vmatprep.subr.mxu0 0.0
  %123 = vmatpush1.msra.mxu0 0.0
  %124 = vmatprep.subr.mxu0 0.0
  %125 = vmatpush1.msra.mxu0 0.0
  %126 = vmatprep.subr.mxu0 0.0
  %127 = vmatpush1.msra.mxu0 0.0
  %128 = vmatprep.subr.mxu0 0.0
  %129 = vmatpush1.msra.mxu0 0.0
  %130 = vmatprep.subr.mxu0 0.0
  %131 = vmatpush1.msra.mxu0 0.0
  %132 = vmatprep.subr.mxu0 0.0
  %133 = vmatpush1.msra.mxu0 0.0
  %134 = vmatprep.subr.mxu0 0.0
  %135 = vmatpush1.msra.mxu0 0.0
  %136 = vmatprep.subr.mxu0 0.0
  %137 = vmatpush1.msra.mxu0 0.0
  %138 = vmatprep.subr.mxu0 0.0
  %139 = vmatpush1.msra.mxu0 0.0
  %140 = vmatprep.subr.mxu0 0.0
  %141 = vmatpush1.msra.mxu0 0.0
  %142 = vmatprep.subr.mxu0 0.0
  %143 = vmatpush1.msra.mxu0 0.0
  %144 = vmatprep.subr.mxu0 0.0
  %145 = vmatpush1.msra.mxu0 0.0
  %146 = vmatprep.subr.mxu0 0.0
  %147 = vmatpush1.msra.mxu0 0.0
  %148 = vmatprep.subr.mxu0 0.0
  %149 = vmatpush1.msra.mxu0 0.0
  %150 = vmatprep.subr.mxu0 0.0
  %151 = vmatpush1.msra.mxu0 0.0
  %152 = vmatprep.subr.mxu0 0.0
  %153 = vmatpush1.msra.mxu0 0.0
  %154 = vmatprep.subr.mxu0 0.0
  %155 = vmatpush1.msra.mxu0 0.0
  %156 = vmatprep.subr.mxu0 0.0
  %157 = vmatpush1.msra.mxu0 0.0
  %158 = vmatprep.subr.mxu0 0.0
  %159 = vmatpush1.msra.mxu0 0.0
  %160 = vmatprep.subr.mxu0 0.0
  %161 = vmatpush1.msra.mxu0 0.0
  %162 = vmatprep.subr.mxu0 0.0
  %163 = vmatpush1.msra.mxu0 0.0
  %164 = vmatprep.subr.mxu0 0.0
  %165 = vmatpush1.msra.mxu0 0.0
  %166 = vmatprep.subr.mxu0 0.0
  %167 = vmatpush1.msra.mxu0 0.0
  %168 = vmatprep.subr.mxu0 0.0
  %169 = vmatpush1.msra.mxu0 0.0
  %170 = vmatprep.mubr.f32.mxu0 0.0
  %171 = vmatmul.mubr.f32.gmra.mrb[0].mxu0 %v83
  %v172 = vpop.f32.mrb[0].mxu0
  %v173 = vadd.f32 0.0, %v172
  %v174 = vpop.f32.mrb[0].mxu0
  %175 = vmatprep.mubr.f32.mxu0 0.0
  %176 = vmatmul.mubr.f32.gmra.mrb[0].mxu0 %v86
  %v177 = vpop.f32.mrb[0].mxu0
  %v178 = vadd.f32 0.0, %v177
  %v179 = vpop.f32.mrb[0].mxu0
  %180 = vmatprep.mubr.f32.mxu0 0.0
  %181 = vmatmul.mubr.f32.gmra.mrb[0].mxu0 %v89
  %v182 = vpop.f32.mrb[0].mxu0
  %v183 = vadd.f32 0.0, %v182
  %v184 = vpop.f32.mrb[0].mxu0
  %185 = vmatprep.mubr.f32.mxu0 0.0
  %186 = vmatmul.mubr.f32.gmra.mrb[0].mxu0 %v92
  %v187 = vpop.f32.mrb[0].mxu0
  %v188 = vadd.f32 0.0, %v187
  %v189 = vpop.f32.mrb[0].mxu0
  %190 = vmatprep.mubr.f32.mxu0 0.0
  %191 = vmatmul.mubr.f32.gmra.mrb[0].mxu0 %v95
  %v192 = vpop.f32.mrb[0].mxu0
  %v193 = vadd.f32 0.0, %v192
  %v194 = vpop.f32.mrb[0].mxu0
  %195 = vmatprep.mubr.f32.mxu0 0.0
  %196 = vmatmul.mubr.f32.gmra.mrb[0].mxu0 %v98
  %v197 = vpop.f32.mrb[0].mxu0
  %v198 = vadd.f32 0.0, %v197
  %v199 = vpop.f32.mrb[0].mxu0
  %200 = vmatprep.mubr.f32.mxu0 0.0
  %201 = vmatmul.mubr.f32.gmra.mrb[0].mxu0 %v101
  %v202 = vpop.f32.mrb[0].mxu0
  %v203 = vadd.f32 0.0, %v202
  %v204 = vpop.f32.mrb[0].mxu0
  %205 = vmatprep.mubr.f32.mxu0 0.0
  %206 = vmatmul.mubr.f32.gmra.mrb[0].mxu0 %v104
  %v207 = vpop.f32.mrb[0].mxu0
  %v208 = vadd.f32 0.0, %v207
  %v209 = vpop.f32.mrb[0].mxu0
  %210 = vdwg.mxu0
  %v211 = vld [vmem:[%s2] sm:$0xf]
  %v212 = vld [vmem:[%s2 + $0x4] sm:$0xf]
  %v213 = vld [vmem:[%s2 + $0x8] sm:$0xf]
  %v214 = vld [vmem:[%s2 + $0xc] sm:$0xf]
  %v219 = vunpack.c.l.b16 %v211
  %v220 = vunpack.c.l.b16 %v212
  %v221 = vunpack.c.l.b16 %v213
  %v222 = vunpack.c.l.b16 %v214
  %v223 = vpack.c.b16 %v220, %v219
  %v224 = vpack.c.b16 %v222, %v221
  %vm227 = vcmask 261120
  %v229 = vsel %vm227, 0, 0
  %231 = vmatprep.subr.bf16.mxu0 0
  %232 = vmatpush1.bf16.msra.mxu0 %v223
  %233 = vmatprep.subr.bf16.mxu0 0
  %234 = vmatpush1.bf16.msra.mxu0 %v224
  %235 = vmatprep.subr.bf16.mxu0 0
  %236 = vmatpush1.bf16.msra.mxu0 0
  %237 = vmatprep.subr.bf16.mxu0 0
  %238 = vmatpush1.bf16.msra.mxu0 0
  %239 = vmatprep.subr.bf16.mxu0 0
  %240 = vmatpush1.bf16.msra.mxu0 0
  %241 = vmatprep.subr.bf16.mxu0 0
  %242 = vmatpush1.bf16.msra.mxu0 0
  %243 = vmatprep.subr.bf16.mxu0 0
  %244 = vmatpush1.bf16.msra.mxu0 0
  %245 = vmatprep.subr.bf16.mxu0 0
  %246 = vmatpush1.bf16.msra.mxu0 0
  %247 = vmatprep.subr.bf16.mxu0 0
  %248 = vmatpush1.bf16.msra.mxu0 0
  %249 = vmatprep.subr.bf16.mxu0 0
  %250 = vmatpush1.bf16.msra.mxu0 0
  %251 = vmatprep.subr.bf16.mxu0 0
  %252 = vmatpush1.bf16.msra.mxu0 0
  %253 = vmatprep.subr.bf16.mxu0 0
  %254 = vmatpush1.bf16.msra.mxu0 0
  %255 = vmatprep.subr.bf16.mxu0 0
  %256 = vmatpush1.bf16.msra.mxu0 0
  %257 = vmatprep.subr.bf16.mxu0 0
  %258 = vmatpush1.bf16.msra.mxu0 0
  %259 = vmatprep.subr.bf16.mxu0 0
  %260 = vmatpush1.bf16.msra.mxu0 0
  %261 = vmatprep.subr.bf16.mxu0 0
  %262 = vmatpush1.bf16.msra.mxu0 0
  %263 = vmatprep.mubr.bf16.mxu0 0
  %264 = vmatmul.mubr.bf16.gmra.mrb[0].mxu0 %v229
  %v265 = vpop.f32.mrb[0].mxu0
  %v266 = vadd.f32 0.0, %v265
  %v267 = vpop.f32.mrb[0].mxu0
  %v268 = vpop.f32.mrb[0].mxu0
  %v269 = vpop.f32.mrb[0].mxu0
  %270 = vdwg.mxu0
  %v271 = vadd.f32 %v173, %v266
  %v272 = vtanh.pop %v271
  %v273 = vpack.c.bf16 %v272, %v272
  %v275 = vsel %vm227, %v273, 0
  %277 = vmatprep.subr.bf16.mxu0 0
  %278 = vmatpush1.bf16.msra.mxu0 %v223
  %279 = vmatprep.subr.bf16.mxu0 0
  %280 = vmatpush1.bf16.msra.mxu0 %v224
  %281 = vmatprep.subr.bf16.mxu0 0
  %282 = vmatpush1.bf16.msra.mxu0 0
  %283 = vmatprep.subr.bf16.mxu0 0
  %284 = vmatpush1.bf16.msra.mxu0 0
  %285 = vmatprep.subr.bf16.mxu0 0
  %286 = vmatpush1.bf16.msra.mxu0 0
  %287 = vmatprep.subr.bf16.mxu0 0
  %288 = vmatpush1.bf16.msra.mxu0 0
  %289 = vmatprep.subr.bf16.mxu0 0
  %290 = vmatpush1.bf16.msra.mxu0 0
  %291 = vmatprep.subr.bf16.mxu0 0
  %292 = vmatpush1.bf16.msra.mxu0 0
  %293 = vmatprep.subr.bf16.mxu0 0
  %294 = vmatpush1.bf16.msra.mxu0 0
  %295 = vmatprep.subr.bf16.mxu0 0
  %296 = vmatpush1.bf16.msra.mxu0 0
  %297 = vmatprep.subr.bf16.mxu0 0
  %298 = vmatpush1.bf16.msra.mxu0 0
  %299 = vmatprep.subr.bf16.mxu0 0
  %300 = vmatpush1.bf16.msra.mxu0 0
  %301 = vmatprep.subr.bf16.mxu0 0
  %302 = vmatpush1.bf16.msra.mxu0 0
  %303 = vmatprep.subr.bf16.mxu0 0
  %304 = vmatpush1.bf16.msra.mxu0 0
  %305 = vmatprep.subr.bf16.mxu0 0
  %306 = vmatpush1.bf16.msra.mxu0 0
  %307 = vmatprep.subr.bf16.mxu0 0
  %308 = vmatpush1.bf16.msra.mxu0 0
  %309 = vmatprep.mubr.bf16.mxu0 0
  %310 = vmatmul.mubr.bf16.gmra.mrb[0].mxu0 %v275
  %v311 = vpop.f32.mrb[0].mxu0
  %v312 = vadd.f32 0.0, %v311
  %v313 = vpop.f32.mrb[0].mxu0
  %v314 = vpop.f32.mrb[0].mxu0
  %v315 = vpop.f32.mrb[0].mxu0
  %316 = vdwg.mxu0
  %v317 = vadd.f32 %v178, %v312
  %v318 = vtanh.pop %v317
  %v319 = vpack.c.bf16 %v318, %v318
  %v321 = vsel %vm227, %v319, 0
  %323 = vmatprep.subr.bf16.mxu0 0
  %324 = vmatpush1.bf16.msra.mxu0 %v223
  %325 = vmatprep.subr.bf16.mxu0 0
  %326 = vmatpush1.bf16.msra.mxu0 %v224
  %327 = vmatprep.subr.bf16.mxu0 0
  %328 = vmatpush1.bf16.msra.mxu0 0
  %329 = vmatprep.subr.bf16.mxu0 0
  %330 = vmatpush1.bf16.msra.mxu0 0
  %331 = vmatprep.subr.bf16.mxu0 0
  %332 = vmatpush1.bf16.msra.mxu0 0
  %333 = vmatprep.subr.bf16.mxu0 0
  %334 = vmatpush1.bf16.msra.mxu0 0
  %335 = vmatprep.subr.bf16.mxu0 0
  %336 = vmatpush1.bf16.msra.mxu0 0
  %337 = vmatprep.subr.bf16.mxu0 0
  %338 = vmatpush1.bf16.msra.mxu0 0
  %339 = vmatprep.subr.bf16.mxu0 0
  %340 = vmatpush1.bf16.msra.mxu0 0
  %341 = vmatprep.subr.bf16.mxu0 0
  %342 = vmatpush1.bf16.msra.mxu0 0
  %343 = vmatprep.subr.bf16.mxu0 0
  %344 = vmatpush1.bf16.msra.mxu0 0
  %345 = vmatprep.subr.bf16.mxu0 0
  %346 = vmatpush1.bf16.msra.mxu0 0
  %347 = vmatprep.subr.bf16.mxu0 0
  %348 = vmatpush1.bf16.msra.mxu0 0
  %349 = vmatprep.subr.bf16.mxu0 0
  %350 = vmatpush1.bf16.msra.mxu0 0
  %351 = vmatprep.subr.bf16.mxu0 0
  %352 = vmatpush1.bf16.msra.mxu0 0
  %353 = vmatprep.subr.bf16.mxu0 0
  %354 = vmatpush1.bf16.msra.mxu0 0
  %355 = vmatprep.mubr.bf16.mxu0 0
  %356 = vmatmul.mubr.bf16.gmra.mrb[0].mxu0 %v321
  %v357 = vpop.f32.mrb[0].mxu0
  %v358 = vadd.f32 0.0, %v357
  %v359 = vpop.f32.mrb[0].mxu0
  %v360 = vpop.f32.mrb[0].mxu0
  %v361 = vpop.f32.mrb[0].mxu0
  %362 = vdwg.mxu0
  %v363 = vadd.f32 %v183, %v358
  %v364 = vtanh.pop %v363
  %v365 = vpack.c.bf16 %v364, %v364
  %v367 = vsel %vm227, %v365, 0
  %369 = vmatprep.subr.bf16.mxu0 0
  %370 = vmatpush1.bf16.msra.mxu0 %v223
  %371 = vmatprep.subr.bf16.mxu0 0
  %372 = vmatpush1.bf16.msra.mxu0 %v224
  %373 = vmatprep.subr.bf16.mxu0 0
  %374 = vmatpush1.bf16.msra.mxu0 0
  %375 = vmatprep.subr.bf16.mxu0 0
  %376 = vmatpush1.bf16.msra.mxu0 0
  %377 = vmatprep.subr.bf16.mxu0 0
  %378 = vmatpush1.bf16.msra.mxu0 0
  %379 = vmatprep.subr.bf16.mxu0 0
  %380 = vmatpush1.bf16.msra.mxu0 0
  %381 = vmatprep.subr.bf16.mxu0 0
  %382 = vmatpush1.bf16.msra.mxu0 0
  %383 = vmatprep.subr.bf16.mxu0 0
  %384 = vmatpush1.bf16.msra.mxu0 0
  %385 = vmatprep.subr.bf16.mxu0 0
  %386 = vmatpush1.bf16.msra.mxu0 0
  %387 = vmatprep.subr.bf16.mxu0 0
  %388 = vmatpush1.bf16.msra.mxu0 0
  %389 = vmatprep.subr.bf16.mxu0 0
  %390 = vmatpush1.bf16.msra.mxu0 0
  %391 = vmatprep.subr.bf16.mxu0 0
  %392 = vmatpush1.bf16.msra.mxu0 0
  %393 = vmatprep.subr.bf16.mxu0 0
  %394 = vmatpush1.bf16.msra.mxu0 0
  %395 = vmatprep.subr.bf16.mxu0 0
  %396 = vmatpush1.bf16.msra.mxu0 0
  %397 = vmatprep.subr.bf16.mxu0 0
  %398 = vmatpush1.bf16.msra.mxu0 0
  %399 = vmatprep.subr.bf16.mxu0 0
  %400 = vmatpush1.bf16.msra.mxu0 0
  %401 = vmatprep.mubr.bf16.mxu0 0
  %402 = vmatmul.mubr.bf16.gmra.mrb[0].mxu0 %v367
  %v403 = vpop.f32.mrb[0].mxu0
  %v404 = vadd.f32 0.0, %v403
  %v405 = vpop.f32.mrb[0].mxu0
  %v406 = vpop.f32.mrb[0].mxu0
  %v407 = vpop.f32.mrb[0].mxu0
  %408 = vdwg.mxu0
  %v409 = vadd.f32 %v188, %v404
  %v410 = vtanh.pop %v409
  %v411 = vpack.c.bf16 %v410, %v410
  %v413 = vsel %vm227, %v411, 0
  %415 = vmatprep.subr.bf16.mxu0 0
  %416 = vmatpush1.bf16.msra.mxu0 %v223
  %417 = vmatprep.subr.bf16.mxu0 0
  %418 = vmatpush1.bf16.msra.mxu0 %v224
  %419 = vmatprep.subr.bf16.mxu0 0
  %420 = vmatpush1.bf16.msra.mxu0 0
  %421 = vmatprep.subr.bf16.mxu0 0
  %422 = vmatpush1.bf16.msra.mxu0 0
  %423 = vmatprep.subr.bf16.mxu0 0
  %424 = vmatpush1.bf16.msra.mxu0 0
  %425 = vmatprep.subr.bf16.mxu0 0
  %426 = vmatpush1.bf16.msra.mxu0 0
  %427 = vmatprep.subr.bf16.mxu0 0
  %428 = vmatpush1.bf16.msra.mxu0 0
  %429 = vmatprep.subr.bf16.mxu0 0
  %430 = vmatpush1.bf16.msra.mxu0 0
  %431 = vmatprep.subr.bf16.mxu0 0
  %432 = vmatpush1.bf16.msra.mxu0 0
  %433 = vmatprep.subr.bf16.mxu0 0
  %434 = vmatpush1.bf16.msra.mxu0 0
  %435 = vmatprep.subr.bf16.mxu0 0
  %436 = vmatpush1.bf16.msra.mxu0 0
  %437 = vmatprep.subr.bf16.mxu0 0
  %438 = vmatpush1.bf16.msra.mxu0 0
  %439 = vmatprep.subr.bf16.mxu0 0
  %440 = vmatpush1.bf16.msra.mxu0 0
  %441 = vmatprep.subr.bf16.mxu0 0
  %442 = vmatpush1.bf16.msra.mxu0 0
  %443 = vmatprep.subr.bf16.mxu0 0
  %444 = vmatpush1.bf16.msra.mxu0 0
  %445 = vmatprep.subr.bf16.mxu0 0
  %446 = vmatpush1.bf16.msra.mxu0 0
  %447 = vmatprep.mubr.bf16.mxu0 0
  %448 = vmatmul.mubr.bf16.gmra.mrb[0].mxu0 %v413
  %v449 = vpop.f32.mrb[0].mxu0
  %v450 = vadd.f32 0.0, %v449
  %v451 = vpop.f32.mrb[0].mxu0
  %v452 = vpop.f32.mrb[0].mxu0
  %v453 = vpop.f32.mrb[0].mxu0
  %454 = vdwg.mxu0
  %v455 = vadd.f32 %v193, %v450
  %v456 = vtanh.pop %v455
  %v457 = vpack.c.bf16 %v456, %v456
  %v459 = vsel %vm227, %v457, 0
  %461 = vmatprep.subr.bf16.mxu0 0
  %462 = vmatpush1.bf16.msra.mxu0 %v223
  %463 = vmatprep.subr.bf16.mxu0 0
  %464 = vmatpush1.bf16.msra.mxu0 %v224
  %465 = vmatprep.subr.bf16.mxu0 0
  %466 = vmatpush1.bf16.msra.mxu0 0
  %467 = vmatprep.subr.bf16.mxu0 0
  %468 = vmatpush1.bf16.msra.mxu0 0
  %469 = vmatprep.subr.bf16.mxu0 0
  %470 = vmatpush1.bf16.msra.mxu0 0
  %471 = vmatprep.subr.bf16.mxu0 0
  %472 = vmatpush1.bf16.msra.mxu0 0
  %473 = vmatprep.subr.bf16.mxu0 0
  %474 = vmatpush1.bf16.msra.mxu0 0
  %475 = vmatprep.subr.bf16.mxu0 0
  %476 = vmatpush1.bf16.msra.mxu0 0
  %477 = vmatprep.subr.bf16.mxu0 0
  %478 = vmatpush1.bf16.msra.mxu0 0
  %479 = vmatprep.subr.bf16.mxu0 0
  %480 = vmatpush1.bf16.msra.mxu0 0
  %481 = vmatprep.subr.bf16.mxu0 0
  %482 = vmatpush1.bf16.msra.mxu0 0
  %483 = vmatprep.subr.bf16.mxu0 0
  %484 = vmatpush1.bf16.msra.mxu0 0
  %485 = vmatprep.subr.bf16.mxu0 0
  %486 = vmatpush1.bf16.msra.mxu0 0
  %487 = vmatprep.subr.bf16.mxu0 0
  %488 = vmatpush1.bf16.msra.mxu0 0
  %489 = vmatprep.subr.bf16.mxu0 0
  %490 = vmatpush1.bf16.msra.mxu0 0
  %491 = vmatprep.subr.bf16.mxu0 0
  %492 = vmatpush1.bf16.msra.mxu0 0
  %493 = vmatprep.mubr.bf16.mxu0 0
  %494 = vmatmul.mubr.bf16.gmra.mrb[0].mxu0 %v459
  %v495 = vpop.f32.mrb[0].mxu0
  %v496 = vadd.f32 0.0, %v495
  %v497 = vpop.f32.mrb[0].mxu0
  %v498 = vpop.f32.mrb[0].mxu0
  %v499 = vpop.f32.mrb[0].mxu0
  %500 = vdwg.mxu0
  %v501 = vadd.f32 %v198, %v496
  %v502 = vtanh.pop %v501
  %v503 = vpack.c.bf16 %v502, %v502
  %v505 = vsel %vm227, %v503, 0
  %507 = vmatprep.subr.bf16.mxu0 0
  %508 = vmatpush1.bf16.msra.mxu0 %v223
  %509 = vmatprep.subr.bf16.mxu0 0
  %510 = vmatpush1.bf16.msra.mxu0 %v224
  %511 = vmatprep.subr.bf16.mxu0 0
  %512 = vmatpush1.bf16.msra.mxu0 0
  %513 = vmatprep.subr.bf16.mxu0 0
  %514 = vmatpush1.bf16.msra.mxu0 0
  %515 = vmatprep.subr.bf16.mxu0 0
  %516 = vmatpush1.bf16.msra.mxu0 0
  %517 = vmatprep.subr.bf16.mxu0 0
  %518 = vmatpush1.bf16.msra.mxu0 0
  %519 = vmatprep.subr.bf16.mxu0 0
  %520 = vmatpush1.bf16.msra.mxu0 0
  %521 = vmatprep.subr.bf16.mxu0 0
  %522 = vmatpush1.bf16.msra.mxu0 0
  %523 = vmatprep.subr.bf16.mxu0 0
  %524 = vmatpush1.bf16.msra.mxu0 0
  %525 = vmatprep.subr.bf16.mxu0 0
  %526 = vmatpush1.bf16.msra.mxu0 0
  %527 = vmatprep.subr.bf16.mxu0 0
  %528 = vmatpush1.bf16.msra.mxu0 0
  %529 = vmatprep.subr.bf16.mxu0 0
  %530 = vmatpush1.bf16.msra.mxu0 0
  %531 = vmatprep.subr.bf16.mxu0 0
  %532 = vmatpush1.bf16.msra.mxu0 0
  %533 = vmatprep.subr.bf16.mxu0 0
  %534 = vmatpush1.bf16.msra.mxu0 0
  %535 = vmatprep.subr.bf16.mxu0 0
  %536 = vmatpush1.bf16.msra.mxu0 0
  %537 = vmatprep.subr.bf16.mxu0 0
  %538 = vmatpush1.bf16.msra.mxu0 0
  %539 = vmatprep.mubr.bf16.mxu0 0
  %540 = vmatmul.mubr.bf16.gmra.mrb[0].mxu0 %v505
  %v541 = vpop.f32.mrb[0].mxu0
  %v542 = vadd.f32 0.0, %v541
  %v543 = vpop.f32.mrb[0].mxu0
  %v544 = vpop.f32.mrb[0].mxu0
  %v545 = vpop.f32.mrb[0].mxu0
  %546 = vdwg.mxu0
  %v547 = vadd.f32 %v203, %v542
  %v548 = vtanh.pop %v547
  %v549 = vpack.c.bf16 %v548, %v548
  %v551 = vsel %vm227, %v549, 0
  %553 = vmatprep.subr.bf16.mxu0 0
  %554 = vmatpush1.bf16.msra.mxu0 %v223
  %555 = vmatprep.subr.bf16.mxu0 0
  %556 = vmatpush1.bf16.msra.mxu0 %v224
  %557 = vmatprep.subr.bf16.mxu0 0
  %558 = vmatpush1.bf16.msra.mxu0 0
  %559 = vmatprep.subr.bf16.mxu0 0
  %560 = vmatpush1.bf16.msra.mxu0 0
  %561 = vmatprep.subr.bf16.mxu0 0
  %562 = vmatpush1.bf16.msra.mxu0 0
  %563 = vmatprep.subr.bf16.mxu0 0
  %564 = vmatpush1.bf16.msra.mxu0 0
  %565 = vmatprep.subr.bf16.mxu0 0
  %566 = vmatpush1.bf16.msra.mxu0 0
  %567 = vmatprep.subr.bf16.mxu0 0
  %568 = vmatpush1.bf16.msra.mxu0 0
  %569 = vmatprep.subr.bf16.mxu0 0
  %570 = vmatpush1.bf16.msra.mxu0 0
  %571 = vmatprep.subr.bf16.mxu0 0
  %572 = vmatpush1.bf16.msra.mxu0 0
  %573 = vmatprep.subr.bf16.mxu0 0
  %574 = vmatpush1.bf16.msra.mxu0 0
  %575 = vmatprep.subr.bf16.mxu0 0
  %576 = vmatpush1.bf16.msra.mxu0 0
  %577 = vmatprep.subr.bf16.mxu0 0
  %578 = vmatpush1.bf16.msra.mxu0 0
  %579 = vmatprep.subr.bf16.mxu0 0
  %580 = vmatpush1.bf16.msra.mxu0 0
  %581 = vmatprep.subr.bf16.mxu0 0
  %582 = vmatpush1.bf16.msra.mxu0 0
  %583 = vmatprep.subr.bf16.mxu0 0
  %584 = vmatpush1.bf16.msra.mxu0 0
  %585 = vmatprep.mubr.bf16.mxu0 0
  %586 = vmatmul.mubr.bf16.gmra.mrb[0].mxu0 %v551
  %v587 = vpop.f32.mrb[0].mxu0
  %v588 = vadd.f32 0.0, %v587
  %v589 = vpop.f32.mrb[0].mxu0
  %v590 = vpop.f32.mrb[0].mxu0
  %v591 = vpop.f32.mrb[0].mxu0
  %592 = vdwg.mxu0
  %v593 = vadd.f32 %v208, %v588
  %v594 = vtanh.pop %v593
  %v595 = vld [vmem:[%s3] sm:$0xff]
  %v596 = vld [vmem:[%s3 + $0x8] sm:$0xff]
  %v597 = vld [vmem:[%s3 + $0x10] sm:$0xff]
  %v598 = vld [vmem:[%s3 + $0x18] sm:$0xff]
  %v599 = vld [vmem:[%s4] sm:$0x1]
  %v601 = vlaneseq
  %v602 = vshrl.u32 %v601, 7
  %v603 = vsub.s32 0, %v602
  %v604 = vrot.slane %v599, %v603
  %v607 = vsel %vm227, %v272, 0
  %v610 = vsel %vm227, %v318, 0
  %v613 = vsel %vm227, %v364, 0
  %v616 = vsel %vm227, %v410, 0
  %v619 = vsel %vm227, %v456, 0
  %v622 = vsel %vm227, %v502, 0
  %v625 = vsel %vm227, %v548, 0
  %v628 = vsel %vm227, %v594, 0
  %630 = vmatprep.subr.mxu0 0.0
  %631 = vmatpush1.msra.mxu0 %v595
  %632 = vmatprep.subr.mxu0 0.0
  %633 = vmatpush1.msra.mxu0 %v596
  %634 = vmatprep.subr.mxu0 0.0
  %635 = vmatpush1.msra.mxu0 %v597
  %636 = vmatprep.subr.mxu0 0.0
  %637 = vmatpush1.msra.mxu0 %v598
  %638 = vmatprep.subr.mxu0 0.0
  %639 = vmatpush1.msra.mxu0 0.0
  %640 = vmatprep.subr.mxu0 0.0
  %641 = vmatpush1.msra.mxu0 0.0
  %642 = vmatprep.subr.mxu0 0.0
  %643 = vmatpush1.msra.mxu0 0.0
  %644 = vmatprep.subr.mxu0 0.0
  %645 = vmatpush1.msra.mxu0 0.0
  %646 = vmatprep.subr.mxu0 0.0
  %647 = vmatpush1.msra.mxu0 0.0
  %648 = vmatprep.subr.mxu0 0.0
  %649 = vmatpush1.msra.mxu0 0.0
  %650 = vmatprep.subr.mxu0 0.0
  %651 = vmatpush1.msra.mxu0 0.0
  %652 = vmatprep.subr.mxu0 0.0
  %653 = vmatpush1.msra.mxu0 0.0
  %654 = vmatprep.subr.mxu0 0.0
  %655 = vmatpush1.msra.mxu0 0.0
  %656 = vmatprep.subr.mxu0 0.0
  %657 = vmatpush1.msra.mxu0 0.0
  %658 = vmatprep.subr.mxu0 0.0
  %659 = vmatpush1.msra.mxu0 0.0
  %660 = vmatprep.subr.mxu0 0.0
  %661 = vmatpush1.msra.mxu0 0.0
  %662 = vmatprep.subr.mxu0 0.0
  %663 = vmatpush1.msra.mxu0 0.0
  %664 = vmatprep.subr.mxu0 0.0
  %665 = vmatpush1.msra.mxu0 0.0
  %666 = vmatprep.subr.mxu0 0.0
  %667 = vmatpush1.msra.mxu0 0.0
  %668 = vmatprep.subr.mxu0 0.0
  %669 = vmatpush1.msra.mxu0 0.0
  %670 = vmatprep.subr.mxu0 0.0
  %671 = vmatpush1.msra.mxu0 0.0
  %672 = vmatprep.subr.mxu0 0.0
  %673 = vmatpush1.msra.mxu0 0.0
  %674 = vmatprep.subr.mxu0 0.0
  %675 = vmatpush1.msra.mxu0 0.0
  %676 = vmatprep.subr.mxu0 0.0
  %677 = vmatpush1.msra.mxu0 0.0
  %678 = vmatprep.subr.mxu0 0.0
  %679 = vmatpush1.msra.mxu0 0.0
  %680 = vmatprep.subr.mxu0 0.0
  %681 = vmatpush1.msra.mxu0 0.0
  %682 = vmatprep.subr.mxu0 0.0
  %683 = vmatpush1.msra.mxu0 0.0
  %684 = vmatprep.subr.mxu0 0.0
  %685 = vmatpush1.msra.mxu0 0.0
  %686 = vmatprep.subr.mxu0 0.0
  %687 = vmatpush1.msra.mxu0 0.0
  %688 = vmatprep.subr.mxu0 0.0
  %689 = vmatpush1.msra.mxu0 0.0
  %690 = vmatprep.subr.mxu0 0.0
  %691 = vmatpush1.msra.mxu0 0.0
  %692 = vmatprep.subr.mxu0 0.0
  %693 = vmatpush1.msra.mxu0 0.0
  %694 = vmatprep.mubr.f32.mxu0 0.0
  %695 = vmatmul.mubr.f32.gmra.mrb[0].mxu0 %v607
  %v696 = vpop.f32.mrb[0].mxu0
  %v697 = vadd.f32 %v604, %v696
  %v698 = vpop.f32.mrb[0].mxu0
  %699 = vmatprep.mubr.f32.mxu0 0.0
  %700 = vmatmul.mubr.f32.gmra.mrb[0].mxu0 %v610
  %v701 = vpop.f32.mrb[0].mxu0
  %v702 = vadd.f32 %v604, %v701
  %v703 = vpop.f32.mrb[0].mxu0
  %704 = vmatprep.mubr.f32.mxu0 0.0
  %705 = vmatmul.mubr.f32.gmra.mrb[0].mxu0 %v613
  %v706 = vpop.f32.mrb[0].mxu0
  %v707 = vadd.f32 %v604, %v706
  %v708 = vpop.f32.mrb[0].mxu0
  %709 = vmatprep.mubr.f32.mxu0 0.0
  %710 = vmatmul.mubr.f32.gmra.mrb[0].mxu0 %v616
  %v711 = vpop.f32.mrb[0].mxu0
  %v712 = vadd.f32 %v604, %v711
  %v713 = vpop.f32.mrb[0].mxu0
  %714 = vmatprep.mubr.f32.mxu0 0.0
  %715 = vmatmul.mubr.f32.gmra.mrb[0].mxu0 %v619
  %v716 = vpop.f32.mrb[0].mxu0
  %v717 = vadd.f32 %v604, %v716
  %v718 = vpop.f32.mrb[0].mxu0
  %719 = vmatprep.mubr.f32.mxu0 0.0
  %720 = vmatmul.mubr.f32.gmra.mrb[0].mxu0 %v622
  %v721 = vpop.f32.mrb[0].mxu0
  %v722 = vadd.f32 %v604, %v721
  %v723 = vpop.f32.mrb[0].mxu0
  %724 = vmatprep.mubr.f32.mxu0 0.0
  %725 = vmatmul.mubr.f32.gmra.mrb[0].mxu0 %v625
  %v726 = vpop.f32.mrb[0].mxu0
  %v727 = vadd.f32 %v604, %v726
  %v728 = vpop.f32.mrb[0].mxu0
  %729 = vmatprep.mubr.f32.mxu0 0.0
  %730 = vmatmul.mubr.f32.gmra.mrb[0].mxu0 %v628
  %v731 = vpop.f32.mrb[0].mxu0
  %v732 = vadd.f32 %v604, %v731
  %v733 = vpop.f32.mrb[0].mxu0
  %734 = vdwg.mxu0
  %735 = vst [vmem:[%s5] sm:$0xff] %v697
  %736 = vst [vmem:[%s5 + $0x8] sm:$0xff] %v702
  %737 = vst [vmem:[%s5 + $0x10] sm:$0xff] %v707
  %738 = vst [vmem:[%s5 + $0x18] sm:$0xff] %v712
  %739 = vst [vmem:[%s5 + $0x20] sm:$0xff] %v717
  %740 = vst [vmem:[%s5 + $0x28] sm:$0xff] %v722
  %741 = vst [vmem:[%s5 + $0x30] sm:$0xff] %v727
  %742 = vst [vmem:[%s5 + $0x38] sm:$0xff] %v732
  // Predicated region
  $region22: #{gen_forward_pallas.1} parent=0 // pred_check
    _
  $region23: #{gen_forward_pallas.1} parent=0 // pred_check_branch
    %744 = sbr.rel (0) target = $region25
  $region24: #{gen_forward_pallas.1} parent=0 // pred_region
    _
  $region25: #{gen_forward_pallas.1} parent=0 // pred_fallthru
    _
  // Predicated region
  $region26: #{gen_forward_pallas.1} parent=0 // pred_check
    _
  $region27: #{gen_forward_pallas.1} parent=0 // pred_check_branch
    %746 = sbr.rel (0) target = $region29
  $region28: #{gen_forward_pallas.1} parent=0 // pred_region
    _
  $region29: #{gen_forward_pallas.1} parent=0 // pred_fallthru
    _

</llo_original>
